<compile_context>
chip_gen: v7x
topology: tpu7x:2x2x1
jax: 0.10.0
libtpu: 0.0.40
codegen_flags: <defaults>
</compile_context>

<pallas_src>
import functools

import jax
import jax.numpy as jnp
from jax import lax
from jax.experimental import pallas as pl
from jax.experimental.pallas import tpu as pltpu


def _mlp_kernel(nlayers, activation, compute_dtype, x_ref, *refs):
    """Fused n-layer MLP, batch-on-lanes compute layout.

    x_ref : (tile_b, in)  row-major block of the input
    refs  : w_0, b_0, ..., w_{n-1}, b_{n-1}, o_ref
            w_l : (out_l, in_l)  (PyTorch-native layout), b_l : (out_l, 1)
    o_ref : (out, tile_b)  — y^T block (batch on lanes, lane-dense store)
    """
    o_ref = refs[-1]
    wb = refs[:-1]

    # TODO(synk): on v6e/v7x a bf16 tanh would double EUP throughput; kept in
    # fp32 here so the identical kernel is also valid on v5e (no bf16 EUP).
    act = jnp.tanh if activation == "tanh" else (lambda v: jnp.maximum(v, 0.0))

    def cast(v):
        return v if compute_dtype is None else v.astype(compute_dtype)

    # Layer 0: contract x's feature axis directly against W0's feature axis
    # ("NT" matmul).  x stays in its loaded row-major (tile_b, in) layout; the
    # MXU path performs the batch->lanes relayout, so there is no wrapper
    # transpose and no explicit in-kernel transpose.
    h = lax.dot_general(
        wb[0][...], x_ref[...],
        dimension_numbers=(((1,), (1,)), ((), ())),
        preferred_element_type=jnp.float32)            # (hidden_0, tile_b) f32
    h = h + wb[1][...]

    for l in range(1, nlayers):
        h = act(h)                                      # fp32 activation
        h = jnp.dot(wb[2 * l][...], cast(h),
                    preferred_element_type=jnp.float32) + wb[2 * l + 1][...]

    o_ref[...] = h.astype(o_ref.dtype)


def _resident(a):
    # Full-extent block, constant index map: DMA'd once, stays VMEM-resident
    # across every batch grid step.
    return pl.BlockSpec(a.shape, lambda *_: (0,) * a.ndim)


def mlp_forward(x, params, activation="relu", tile_b=8192, compute_dtype=None):
    """Forward pass of the MLP.

    x       : (batch, in_features), same layout as the PyTorch module input.
    params  : [(W_0, b_0), ..., (W_{n-1}, b_{n-1})] with W_l shaped (out, in)
              (PyTorch-native) and b_l shaped (out, 1).  nlayers = len(params).
    tile_b  : batch rows per grid step (rounded to a multiple of 128 lanes).
              Default 8192; sweep 4096–32768.  Very large fp32 tiles may need
              a higher vmem_limit_bytes.
    compute_dtype : None (exact fp32) or jnp.bfloat16 — bf16 MXU inputs with
              fp32 accumulation; recommended on v5e/v6e/v7x (all bf16-native
              MXUs).  Bias/activation math stays fp32 either way.
    """
    nlayers = len(params)
    assert nlayers >= 2
    batch, in_size = x.shape
    out_size = params[-1][0].shape[0]

    # --- batch tile selection -------------------------------------------
    lane = 128
    padded = max(pl.cdiv(batch, lane) * lane, lane)
    tile_b = max(lane, min(int(tile_b), padded))
    if padded >= 2 * lane:
        # Guarantee >= 2 grid steps so ("parallel",) can use both v7x cores.
        tile_b = min(tile_b, (padded // 2) // lane * lane)
    tile_b = (tile_b // lane) * lane
    grid = (pl.cdiv(batch, tile_b),)

    # --- one-time dtype handling (no per-grid-step casts in the kernel) ---
    if compute_dtype is not None:
        x_in = x.astype(compute_dtype)
        flat = []
        for (w, b) in params:
            flat += [w.astype(compute_dtype), b]        # biases stay fp32
    else:
        x_in = x
        flat = [t for wb in params for t in wb]

    in_specs = [pl.BlockSpec((tile_b, in_size), lambda i: (i, 0))] \
        + [_resident(t) for t in flat]

    yt = pl.pallas_call(
        functools.partial(_mlp_kernel, nlayers, activation, compute_dtype),
        out_shape=jax.ShapeDtypeStruct((out_size, batch), jnp.float32),
        grid=grid,
        in_specs=in_specs,
        out_specs=pl.BlockSpec((out_size, tile_b), lambda i: (0, i)),
        compiler_params=pltpu.CompilerParams(
            dimension_semantics=("parallel",),
            # Headroom for large batch tiles; stays below v7x's 64 MiB
            # physical VMEM (v5e/v6e have 128 MiB).
            vmem_limit_bytes=48 * 1024 * 1024),
    )(x_in, *flat)

    # Back to the module's (batch, out_features) layout (tiny transpose on y).
    return yt.T


def init_mlp_params(key, input_size, hidden_size, output_size, nlayers=3,
                    initialisation=None):
    """Parameter init mirroring the PyTorch module, weights in (out, in) layout.

    First layer: nn.Linear default (kaiming_uniform(a=sqrt(5)) for W and
    uniform(+-1/sqrt(fan_in)) for b, i.e. both U(-1/sqrt(fan_in), +1/sqrt(fan_in))).
    Hidden layers: W ~ N(0, 0.01), b = 0.  Last layer: zeros if
    initialisation == 'zeros', else W ~ N(0, 0.01), b = 0.
    Biases are stored as (out, 1) for the batch-on-lanes kernel.
    (Distributions match PyTorch; the exact random draws do not.)
    """
    assert nlayers >= 2
    dims = [input_size] + [hidden_size] * (nlayers - 1) + [output_size]
    params = []
    keys = jax.random.split(key, 2 * nlayers)
    for i in range(nlayers):
        fan_in, fan_out = dims[i], dims[i + 1]
        wk, bk = keys[2 * i], keys[2 * i + 1]
        bound = float(fan_in) ** -0.5
        if i == 0:
            w = jax.random.uniform(wk, (fan_out, fan_in), jnp.float32,
                                   -bound, bound)
            b = jax.random.uniform(bk, (fan_out, 1), jnp.float32,
                                   -bound, bound)
        elif i == nlayers - 1 and initialisation == "zeros":
            w = jnp.zeros((fan_out, fan_in), jnp.float32)
            b = jnp.zeros((fan_out, 1), jnp.float32)
        else:
            w = 0.01 * jax.random.normal(wk, (fan_out, fan_in), jnp.float32)
            b = jnp.zeros((fan_out, 1), jnp.float32)
        params.append((w, b))
    return params


def mlp_reference(x, params, activation="relu"):
    """Pure-JAX reference in standard row-major form (matches nn.Linear)."""
    act = jnp.tanh if activation == "tanh" else (lambda v: jnp.maximum(v, 0.0))
    h = x
    for (w, b) in params[:-1]:
        h = act(h @ w.T + b.T)
    w, b = params[-1]
    return h @ w.T + b.T


if __name__ == "__main__":
    key = jax.random.PRNGKey(0)
    k_x, k_p, k_p2 = jax.random.split(key, 3)

    # Fitzhugh-Nagumo-sized MLP: 4 -> 32 -> 32 -> 2, relu.
    # batch=300 is not a multiple of 128, so the ragged last tile is
    # exercised; the tile clamp yields a 3-step batch grid (>= 2 steps).
    batch, input_size, hidden_size, output_size = 300, 4, 32, 2
    x = jax.random.normal(k_x, (batch, input_size), jnp.float32)

    params = init_mlp_params(k_p, input_size, hidden_size, output_size,
                             nlayers=3, initialisation=None)
    ref = mlp_reference(x, params, activation="relu")

    # fp32 MXU path (exact).
    out = mlp_forward(x, params, activation="relu")
    out = jax.block_until_ready(out)
    assert out.shape == (batch, output_size)
    assert jnp.allclose(out, ref, atol=3e-5, rtol=1e-3), "fp32 mismatch vs reference"

    # bf16-input MXU path (recommended on v5e/v6e/v7x): fp32 accumulation,
    # fp32 bias/activations, x/weights cast once in the wrapper.
    out_bf16 = mlp_forward(x, params, activation="relu",
                           compute_dtype=jnp.bfloat16)
    out_bf16 = jax.block_until_ready(out_bf16)
    assert out_bf16.shape == (batch, output_size)
    assert jnp.allclose(out_bf16, ref, atol=2e-4, rtol=2e-1), "bf16 mismatch vs reference"

    # Deeper / tanh variant exercises the generic layer loop (nlayers=4).
    params4 = init_mlp_params(k_p2, input_size, hidden_size, output_size,
                              nlayers=4, initialisation=None)
    ref4 = mlp_reference(x, params4, activation="tanh")
    out4 = jax.block_until_ready(mlp_forward(x, params4, activation="tanh"))
    assert out4.shape == (batch, output_size)
    assert jnp.allclose(out4, ref4, atol=3e-5, rtol=1e-3), "nlayers=4 tanh mismatch"

    print("KERNEL_OK")
</pallas_src>

<mosaic_0001>
module attributes {stable_mosaic.version = 11 : i64} {
  func.func @_mlp_kernel(%arg0: i32, %arg1: memref<128x4xf32, #tpu.memory_space<vmem>>, %arg2: memref<32x4xf32, #tpu.memory_space<vmem>>, %arg3: memref<32x1xf32, #tpu.memory_space<vmem>>, %arg4: memref<32x32xf32, #tpu.memory_space<vmem>>, %arg5: memref<32x1xf32, #tpu.memory_space<vmem>>, %arg6: memref<2x32xf32, #tpu.memory_space<vmem>>, %arg7: memref<2x1xf32, #tpu.memory_space<vmem>>, %arg8: memref<2x128xf32, #tpu.memory_space<vmem>>) attributes {dimension_semantics = [#tpu.dimension_semantics<parallel>], iteration_bounds = array<i64: 3>, scalar_prefetch = 0 : i64, scratch_operands = 0 : i64, tpu.core_type = #tpu.core_type<tc>, window_params = [{transform_indices = @transform_0, window_bounds = array<i64: 128, 4>}, {pipeline_mode = #tpu.pipeline_mode<synchronous>, transform_indices = @transform_1, window_bounds = array<i64: 32, 4>}, {pipeline_mode = #tpu.pipeline_mode<synchronous>, transform_indices = @transform_2, window_bounds = array<i64: 32, 1>}, {pipeline_mode = #tpu.pipeline_mode<synchronous>, transform_indices = @transform_3, window_bounds = array<i64: 32, 32>}, {pipeline_mode = #tpu.pipeline_mode<synchronous>, transform_indices = @transform_4, window_bounds = array<i64: 32, 1>}, {pipeline_mode = #tpu.pipeline_mode<synchronous>, transform_indices = @transform_5, window_bounds = array<i64: 2, 32>}, {pipeline_mode = #tpu.pipeline_mode<synchronous>, transform_indices = @transform_6, window_bounds = array<i64: 2, 1>}, {transform_indices = @transform_7, window_bounds = array<i64: 2, 128>}]} {
    %c0 = arith.constant 0 : index
    %c0_0 = arith.constant 0 : index
    %0 = vector.load %arg2[%c0, %c0_0] : memref<32x4xf32, #tpu.memory_space<vmem>>, vector<32x4xf32>
    %c0_1 = arith.constant 0 : index
    %c0_2 = arith.constant 0 : index
    %1 = vector.load %arg1[%c0_1, %c0_2] : memref<128x4xf32, #tpu.memory_space<vmem>>, vector<128x4xf32>
    %cst = arith.constant dense<0.000000e+00> : vector<32x128xf32>
    %2 = tpu.matmul %0, %1, %cst {dimension_numbers = #tpu.dot_dimension_numbers<[1], [1], [0], [0], [0, 0, 1, 0], [], []>} : vector<32x4xf32>, vector<128x4xf32>, vector<32x128xf32> -> vector<32x128xf32>
    %c0_3 = arith.constant 0 : index
    %c0_4 = arith.constant 0 : index
    %3 = vector.load %arg3[%c0_3, %c0_4] : memref<32x1xf32, #tpu.memory_space<vmem>>, vector<32x1xf32>
    %4 = vector.broadcast %3 : vector<32x1xf32> to vector<32x128xf32>
    %5 = arith.addf %2, %4 : vector<32x128xf32>
    %cst_5 = arith.constant 0.000000e+00 : f32
    %6 = vector.broadcast %cst_5 : f32 to vector<32x128xf32>
    %7 = arith.maximumf %5, %6 : vector<32x128xf32>
    %c0_6 = arith.constant 0 : index
    %c0_7 = arith.constant 0 : index
    %8 = vector.load %arg4[%c0_6, %c0_7] : memref<32x32xf32, #tpu.memory_space<vmem>>, vector<32x32xf32>
    %cst_8 = arith.constant dense<0.000000e+00> : vector<32x128xf32>
    %9 = tpu.matmul %8, %7, %cst_8 {dimension_numbers = #tpu.dot_dimension_numbers<[1], [0], [0], [1], [0, 0, 1, 1], [], []>} : vector<32x32xf32>, vector<32x128xf32>, vector<32x128xf32> -> vector<32x128xf32>
    %c0_9 = arith.constant 0 : index
    %c0_10 = arith.constant 0 : index
    %10 = vector.load %arg5[%c0_9, %c0_10] : memref<32x1xf32, #tpu.memory_space<vmem>>, vector<32x1xf32>
    %11 = vector.broadcast %10 : vector<32x1xf32> to vector<32x128xf32>
    %12 = arith.addf %9, %11 : vector<32x128xf32>
    %cst_11 = arith.constant 0.000000e+00 : f32
    %13 = vector.broadcast %cst_11 : f32 to vector<32x128xf32>
    %14 = arith.maximumf %12, %13 : vector<32x128xf32>
    %c0_12 = arith.constant 0 : index
    %c0_13 = arith.constant 0 : index
    %15 = vector.load %arg6[%c0_12, %c0_13] : memref<2x32xf32, #tpu.memory_space<vmem>>, vector<2x32xf32>
    %cst_14 = arith.constant dense<0.000000e+00> : vector<2x128xf32>
    %16 = tpu.matmul %15, %14, %cst_14 {dimension_numbers = #tpu.dot_dimension_numbers<[1], [0], [0], [1], [0, 0, 1, 1], [], []>} : vector<2x32xf32>, vector<32x128xf32>, vector<2x128xf32> -> vector<2x128xf32>
    %c0_15 = arith.constant 0 : index
    %c0_16 = arith.constant 0 : index
    %17 = vector.load %arg7[%c0_15, %c0_16] : memref<2x1xf32, #tpu.memory_space<vmem>>, vector<2x1xf32>
    %18 = vector.broadcast %17 : vector<2x1xf32> to vector<2x128xf32>
    %19 = arith.addf %16, %18 : vector<2x128xf32>
    %c0_17 = arith.constant 0 : index
    %c0_18 = arith.constant 0 : index
    %20 = vector.load %arg8[%c0_17, %c0_18] : memref<2x128xf32, #tpu.memory_space<vmem>>, vector<2x128xf32>
    tpu.vector_store %arg8[%c0_17, %c0_18], %19 {strides = array<i32>} : memref<2x128xf32, #tpu.memory_space<vmem>>, vector<2x128xf32>,
    return
  }
  func.func @transform_0(%arg0: i32) -> (i32, i32) {
    %c0_i32 = arith.constant 0 : i32
    %c0_i32_0 = arith.constant 0 : i32
    return %arg0, %c0_i32 : i32, i32
  }
  func.func @transform_1(%arg0: i32) -> (i32, i32) {
    %c0_i32 = arith.constant 0 : i32
    %c0_i32_0 = arith.constant 0 : i32
    %c0_i32_1 = arith.constant 0 : i32
    return %c0_i32, %c0_i32_0 : i32, i32
  }
  func.func @transform_2(%arg0: i32) -> (i32, i32) {
    %c0_i32 = arith.constant 0 : i32
    %c0_i32_0 = arith.constant 0 : i32
    %c0_i32_1 = arith.constant 0 : i32
    return %c0_i32, %c0_i32_0 : i32, i32
  }
  func.func @transform_3(%arg0: i32) -> (i32, i32) {
    %c0_i32 = arith.constant 0 : i32
    %c0_i32_0 = arith.constant 0 : i32
    %c0_i32_1 = arith.constant 0 : i32
    return %c0_i32, %c0_i32_0 : i32, i32
  }
  func.func @transform_4(%arg0: i32) -> (i32, i32) {
    %c0_i32 = arith.constant 0 : i32
    %c0_i32_0 = arith.constant 0 : i32
    %c0_i32_1 = arith.constant 0 : i32
    return %c0_i32, %c0_i32_0 : i32, i32
  }
  func.func @transform_5(%arg0: i32) -> (i32, i32) {
    %c0_i32 = arith.constant 0 : i32
    %c0_i32_0 = arith.constant 0 : i32
    %c0_i32_1 = arith.constant 0 : i32
    return %c0_i32, %c0_i32_0 : i32, i32
  }
  func.func @transform_6(%arg0: i32) -> (i32, i32) {
    %c0_i32 = arith.constant 0 : i32
    %c0_i32_0 = arith.constant 0 : i32
    %c0_i32_1 = arith.constant 0 : i32
    return %c0_i32, %c0_i32_0 : i32, i32
  }
  func.func @transform_7(%arg0: i32) -> (i32, i32) {
    %c0_i32 = arith.constant 0 : i32
    %c0_i32_0 = arith.constant 0 : i32
    return %c0_i32, %arg0 : i32, i32
  }
}

</mosaic_0001>

<llo_original>
// kernel: tpu_custom_call.1
$region0: #{tpu_custom_call.1}
  #allocation0 [shape = 'u32[]', space=smem, size = 0x4, offset = 0x4, fixed_abs, tag = 'smem constant byte address 0x4 - core index']
  #allocation1 [shape = 'u32[144,128]{1,0:T(1,128)}', space=vmem, size = 0x12000, scoped, tag = 'internal scratch']
  %s0 = inlined_call_operand.vmem [shape: f32[300,4], index: 0, kind: input, shape index: {}]
  %s1 = inlined_call_operand.vmem [shape: f32[32,4], index: 1, kind: input, shape index: {}]
  %s2 = inlined_call_operand.vmem [shape: f32[32,1], index: 2, kind: input, shape index: {}]
  %s3 = inlined_call_operand.vmem [shape: f32[32,32], index: 3, kind: input, shape index: {}]
  %s4 = inlined_call_operand.vmem [shape: f32[32,1], index: 4, kind: input, shape index: {}]
  %s5 = inlined_call_operand.vmem [shape: f32[2,32], index: 5, kind: input, shape index: {}]
  %s6 = inlined_call_operand.vmem [shape: f32[2,1], index: 6, kind: input, shape index: {}]
  %s7 = inlined_call_operand.hbm [shape: f32[2,300], index: 7, kind: output, shape index: {}]
  %s8 = sld [smem:[#allocation0]]
  $region61: #{tpu_custom_call.1} parent=0
    _
  %s10 = ssub.s32 1, %s8
  %s11 = scalar_select 0, %s10, %s8
  $region1: #{tpu_custom_call.1} parent=0
    #allocation2 [shape = 'u8[2048]{0}', space=vmem, size = 0x800, scoped, tag = 'output window, operand 0']
    #allocation3 [shape = 's32[2]{0}', space=sflag, size = 0x8, scoped, tag = 'scoped memory for tpu_custom_call.1']
    %12 = vsyncpa [#allocation3], 0
    %s13 = scalar_lea.sflag [#allocation3], 1
    %14 = vsyncpa %s13, 0
    loop: start=0, step=1, limit=5
    $region2: #{tpu_custom_call.1} parent=1 // loop_pre_header
      _
    $region3: #{tpu_custom_call.1} parent=1 // loop_header
      %s16 = sphi 0, %s20
      %p17 = scmp.ge.s32.totalorder %s16, 5
      %s26 = sphi 0, %s28
      %s29 = sphi 0, %s26
      %s30 = sphi 0, %s29
      %s46 = sphi 0, %s30
      %s50 = sphi 0, %s50
      %s52 = sphi 0, %s50
      %s53 = sphi 0, %s52
      %s67 = sphi 0, %s53
      %s71 = sphi 0, %s71
      %s73 = sphi 0, %s71
      %s74 = sphi 0, %s73
      %s88 = sphi 0, %s74
      %s92 = sphi 0, %s92
      %s94 = sphi 0, %s92
      %s95 = sphi 0, %s94
      %s109 = sphi 0, %s95
      %s113 = sphi 0, %s113
      %s115 = sphi 0, %s113
      %s116 = sphi 0, %s115
      %s130 = sphi 0, %s116
      %s134 = sphi 0, %s134
      %s136 = sphi 0, %s134
      %s137 = sphi 0, %s136
      %s151 = sphi 0, %s137
      %s155 = sphi 0, %s155
      %s157 = sphi 0, %s155
      %s158 = sphi 0, %s157
      %s172 = sphi 0, %s158
      %s178 = sphi 0, %s180
      %s181 = sphi 0, %s178
      %s182 = sphi 0, %s181
      %s198 = sphi 0, %s182
    $region4: #{tpu_custom_call.1} parent=1 // loop_header_branch
      %19 = sbr.rel (%p17) target = $region8
    $region5: #{tpu_custom_call.1} parent=1 // loop_body
      %s21 = ssub.s32 %s16, 1
      %s22 = ssub.s32 %s16, 2
      %s23 = sadd.s32 %s16, 1
      %s24 = ssub.s32 %s16, %s23
      %p25 = scmp.eq.s32.totalorder %s24, 0
      %s27 = sadd.s32 %s26, 1
      %s28 = scalar_select %p25, %s26, %s27
      %p31 = pneg %p25
      %p32 = scmp.eq.s32.totalorder %s16, 2
      %p33 = por %p31, %p32
      %p34 = scmp.ne.s32.totalorder %s26, %s29
      %p35 = scmp.eq.s32.totalorder %s16, 0
      %p36 = por %p34, %p35
      %p37 = scmp.ne.s32.totalorder %s26, %s29
      %p38 = scmp.eq.s32.totalorder %s21, 2
      %p39 = por %p37, %p38
      %p40 = scmp.ne.s32.totalorder %s29, %s30
      %p41 = scmp.eq.s32.totalorder %s21, 0
      %p42 = por %p40, %p41
      %p43 = scmp.ne.s32.totalorder %s29, %s30
      %p44 = scmp.eq.s32.totalorder %s22, 2
      %p45 = por %p43, %p44
      %p47 = scmp.ne.s32.totalorder %s30, %s46
      %p48 = scmp.eq.s32.totalorder %s22, 0
      %p49 = por %p47, %p48
      %s51 = sadd.s32 %s50, 1
      %p54 = scmp.eq.s32.totalorder %s16, 2
      %p55 = scmp.ne.s32.totalorder %s50, %s52
      %p56 = scmp.eq.s32.totalorder %s16, 0
      %p57 = por %p55, %p56
      %p58 = scmp.ne.s32.totalorder %s50, %s52
      %p59 = scmp.eq.s32.totalorder %s21, 2
      %p60 = por %p58, %p59
      %p61 = scmp.ne.s32.totalorder %s52, %s53
      %p62 = scmp.eq.s32.totalorder %s21, 0
      %p63 = por %p61, %p62
      %p64 = scmp.ne.s32.totalorder %s52, %s53
      %p65 = scmp.eq.s32.totalorder %s22, 2
      %p66 = por %p64, %p65
      %p68 = scmp.ne.s32.totalorder %s53, %s67
      %p69 = scmp.eq.s32.totalorder %s22, 0
      %p70 = por %p68, %p69
      %s72 = sadd.s32 %s71, 1
      %p75 = scmp.eq.s32.totalorder %s16, 2
      %p76 = scmp.ne.s32.totalorder %s71, %s73
      %p77 = scmp.eq.s32.totalorder %s16, 0
      %p78 = por %p76, %p77
      %p79 = scmp.ne.s32.totalorder %s71, %s73
      %p80 = scmp.eq.s32.totalorder %s21, 2
      %p81 = por %p79, %p80
      %p82 = scmp.ne.s32.totalorder %s73, %s74
      %p83 = scmp.eq.s32.totalorder %s21, 0
      %p84 = por %p82, %p83
      %p85 = scmp.ne.s32.totalorder %s73, %s74
      %p86 = scmp.eq.s32.totalorder %s22, 2
      %p87 = por %p85, %p86
      %p89 = scmp.ne.s32.totalorder %s74, %s88
      %p90 = scmp.eq.s32.totalorder %s22, 0
      %p91 = por %p89, %p90
      %s93 = sadd.s32 %s92, 1
      %p96 = scmp.eq.s32.totalorder %s16, 2
      %p97 = scmp.ne.s32.totalorder %s92, %s94
      %p98 = scmp.eq.s32.totalorder %s16, 0
      %p99 = por %p97, %p98
      %p100 = scmp.ne.s32.totalorder %s92, %s94
      %p101 = scmp.eq.s32.totalorder %s21, 2
      %p102 = por %p100, %p101
      %p103 = scmp.ne.s32.totalorder %s94, %s95
      %p104 = scmp.eq.s32.totalorder %s21, 0
      %p105 = por %p103, %p104
      %p106 = scmp.ne.s32.totalorder %s94, %s95
      %p107 = scmp.eq.s32.totalorder %s22, 2
      %p108 = por %p106, %p107
      %p110 = scmp.ne.s32.totalorder %s95, %s109
      %p111 = scmp.eq.s32.totalorder %s22, 0
      %p112 = por %p110, %p111
      %s114 = sadd.s32 %s113, 1
      %p117 = scmp.eq.s32.totalorder %s16, 2
      %p118 = scmp.ne.s32.totalorder %s113, %s115
      %p119 = scmp.eq.s32.totalorder %s16, 0
      %p120 = por %p118, %p119
      %p121 = scmp.ne.s32.totalorder %s113, %s115
      %p122 = scmp.eq.s32.totalorder %s21, 2
      %p123 = por %p121, %p122
      %p124 = scmp.ne.s32.totalorder %s115, %s116
      %p125 = scmp.eq.s32.totalorder %s21, 0
      %p126 = por %p124, %p125
      %p127 = scmp.ne.s32.totalorder %s115, %s116
      %p128 = scmp.eq.s32.totalorder %s22, 2
      %p129 = por %p127, %p128
      %p131 = scmp.ne.s32.totalorder %s116, %s130
      %p132 = scmp.eq.s32.totalorder %s22, 0
      %p133 = por %p131, %p132
      %s135 = sadd.s32 %s134, 1
      %p138 = scmp.eq.s32.totalorder %s16, 2
      %p139 = scmp.ne.s32.totalorder %s134, %s136
      %p140 = scmp.eq.s32.totalorder %s16, 0
      %p141 = por %p139, %p140
      %p142 = scmp.ne.s32.totalorder %s134, %s136
      %p143 = scmp.eq.s32.totalorder %s21, 2
      %p144 = por %p142, %p143
      %p145 = scmp.ne.s32.totalorder %s136, %s137
      %p146 = scmp.eq.s32.totalorder %s21, 0
      %p147 = por %p145, %p146
      %p148 = scmp.ne.s32.totalorder %s136, %s137
      %p149 = scmp.eq.s32.totalorder %s22, 2
      %p150 = por %p148, %p149
      %p152 = scmp.ne.s32.totalorder %s137, %s151
      %p153 = scmp.eq.s32.totalorder %s22, 0
      %p154 = por %p152, %p153
      %s156 = sadd.s32 %s155, 1
      %p159 = scmp.eq.s32.totalorder %s16, 2
      %p160 = scmp.ne.s32.totalorder %s155, %s157
      %p161 = scmp.eq.s32.totalorder %s16, 0
      %p162 = por %p160, %p161
      %p163 = scmp.ne.s32.totalorder %s155, %s157
      %p164 = scmp.eq.s32.totalorder %s21, 2
      %p165 = por %p163, %p164
      %p166 = scmp.ne.s32.totalorder %s157, %s158
      %p167 = scmp.eq.s32.totalorder %s21, 0
      %p168 = por %p166, %p167
      %p169 = scmp.ne.s32.totalorder %s157, %s158
      %p170 = scmp.eq.s32.totalorder %s22, 2
      %p171 = por %p169, %p170
      %p173 = scmp.ne.s32.totalorder %s158, %s172
      %p174 = scmp.eq.s32.totalorder %s22, 0
      %p175 = por %p173, %p174
      %s176 = ssub.s32 %s16, %s23
      %p177 = scmp.eq.s32.totalorder %s176, 0
      %s179 = sadd.s32 %s178, 1
      %s180 = scalar_select %p177, %s178, %s179
      %p183 = pneg %p177
      %p184 = scmp.eq.s32.totalorder %s16, 2
      %p185 = por %p183, %p184
      %p186 = scmp.ne.s32.totalorder %s178, %s181
      %p187 = scmp.eq.s32.totalorder %s16, 0
      %p188 = por %p186, %p187
      %p189 = scmp.ne.s32.totalorder %s178, %s181
      %p190 = scmp.eq.s32.totalorder %s21, 2
      %p191 = por %p189, %p190
      %p192 = scmp.ne.s32.totalorder %s181, %s182
      %p193 = scmp.eq.s32.totalorder %s21, 0
      %p194 = por %p192, %p193
      %p195 = scmp.ne.s32.totalorder %s181, %s182
      %p196 = scmp.eq.s32.totalorder %s22, 2
      %p197 = por %p195, %p196
      %p199 = scmp.ne.s32.totalorder %s182, %s198
      %p200 = scmp.eq.s32.totalorder %s22, 0
      %p201 = por %p199, %p200
      %p202 = scmp.le.s32.totalorder 1, %s16
      %p203 = scmp.lt.s32.totalorder %s16, 4
      %p204 = pnand %p202, %p203
      %p205 = pneg %p204
      // Predicated region
      $region9: #{tpu_custom_call.1} parent=5 // pred_check
        _
      $region10: #{tpu_custom_call.1} parent=5 // pred_check_branch
        %207 = sbr.rel (%p204) target = $region12
      $region11: #{tpu_custom_call.1} parent=5 // pred_region
        %s208 = ssub.s32 %s16, 1
        // Predicated region
        $region13: #{tpu_custom_call.1} parent=11 // pred_check
          %p209 = pneg %p63
        $region14: #{tpu_custom_call.1} parent=11 // pred_check_branch
          %211 = sbr.rel (%p209) target = $region16
        $region15: #{tpu_custom_call.1} parent=11 // pred_region
          _
        $region16: #{tpu_custom_call.1} parent=11 // pred_fallthru
          _
        // Predicated region
        $region17: #{tpu_custom_call.1} parent=11 // pred_check
          %p212 = pneg %p84
        $region18: #{tpu_custom_call.1} parent=11 // pred_check_branch
          %214 = sbr.rel (%p212) target = $region20
        $region19: #{tpu_custom_call.1} parent=11 // pred_region
          _
        $region20: #{tpu_custom_call.1} parent=11 // pred_fallthru
          _
        // Predicated region
        $region21: #{tpu_custom_call.1} parent=11 // pred_check
          %p215 = pneg %p105
        $region22: #{tpu_custom_call.1} parent=11 // pred_check_branch
          %217 = sbr.rel (%p215) target = $region24
        $region23: #{tpu_custom_call.1} parent=11 // pred_region
          _
        $region24: #{tpu_custom_call.1} parent=11 // pred_fallthru
          _
        // Predicated region
        $region25: #{tpu_custom_call.1} parent=11 // pred_check
          %p218 = pneg %p126
        $region26: #{tpu_custom_call.1} parent=11 // pred_check_branch
          %220 = sbr.rel (%p218) target = $region28
        $region27: #{tpu_custom_call.1} parent=11 // pred_region
          _
        $region28: #{tpu_custom_call.1} parent=11 // pred_fallthru
          _
        // Predicated region
        $region29: #{tpu_custom_call.1} parent=11 // pred_check
          %p221 = pneg %p147
        $region30: #{tpu_custom_call.1} parent=11 // pred_check_branch
          %223 = sbr.rel (%p221) target = $region32
        $region31: #{tpu_custom_call.1} parent=11 // pred_region
          _
        $region32: #{tpu_custom_call.1} parent=11 // pred_fallthru
          _
        // Predicated region
        $region33: #{tpu_custom_call.1} parent=11 // pred_check
          %p224 = pneg %p168
        $region34: #{tpu_custom_call.1} parent=11 // pred_check_branch
          %226 = sbr.rel (%p224) target = $region36
        $region35: #{tpu_custom_call.1} parent=11 // pred_region
          _
        $region36: #{tpu_custom_call.1} parent=11 // pred_fallthru
          _
      $region12: #{tpu_custom_call.1} parent=5 // pred_fallthru
        _
      %p227 = scmp.lt.s32.totalorder %s16, 3
      // Predicated region
      $region37: #{tpu_custom_call.1} parent=5 // pred_check
        %p228 = pneg %p227
      $region38: #{tpu_custom_call.1} parent=5 // pred_check_branch
        %230 = sbr.rel (%p228) target = $region40
      $region39: #{tpu_custom_call.1} parent=5 // pred_region
        // Predicated region
        $region41: #{tpu_custom_call.1} parent=39 // pred_check
          %p231 = pneg %p36
        $region42: #{tpu_custom_call.1} parent=39 // pred_check_branch
          %233 = sbr.rel (%p231) target = $region44
        $region43: #{tpu_custom_call.1} parent=39 // pred_region
          %s234 = smul.u32 16, %s16
          %s235 = ssub.s32 38, %s234
          %p236 = scmp.lt.s32.totalorder %s235, 16
          %s237 = scalar_select %p236, %s235, 16
          %s238 = smul.u32 128, %s237
          %p239 = scmp.lt.s32.totalorder %s234, 37
          %s240 = scalar_select %p239, %s234, 37
          %s241 = smul.addr %s240, 8
          %s242 = scalar_lea.vmem %s0, %s241
          %s243 = smul.u32 16, %s16
          %s244 = ssub.s32 38, %s243
          %p245 = scmp.lt.s32.totalorder %s244, 16
          %s246 = scalar_select %p245, %s244, 16
          %s247 = smul.u32 128, %s246
        $region44: #{tpu_custom_call.1} parent=39 // pred_fallthru
          _
      $region40: #{tpu_custom_call.1} parent=5 // pred_fallthru
        _
      %p248 = scmp.le.s32.totalorder 1, %s16
      %p249 = scmp.lt.s32.totalorder %s16, 4
      %p250 = pnand %p248, %p249
      %p251 = pneg %p250
      // Predicated region
      $region45: #{tpu_custom_call.1} parent=5 // pred_check
        _
      $region46: #{tpu_custom_call.1} parent=5 // pred_check_branch
        %253 = sbr.rel (%p250) target = $region48
      $region47: #{tpu_custom_call.1} parent=5 // pred_region
        %s254 = ssub.s32 %s16, 1
        %s255 = smul.u32 16, %s21
        %s256 = ssub.s32 38, %s255
        %p257 = scmp.lt.s32.totalorder %s256, 16
        %s258 = scalar_select %p257, %s256, 16
        %s259 = smul.u32 128, %s258
        %p260 = scmp.lt.s32.totalorder %s255, 37
        %s261 = scalar_select %p260, %s255, 37
        %s262 = smul.addr %s261, 8
        %s263 = scalar_lea.vmem %s0, %s262
        %p264 = pneg %p42
        %p265 = pneg %p39
        %p266 = pneg %p63
        %p267 = pneg %p60
        %p268 = pneg %p84
        %p269 = pneg %p81
        %p270 = pneg %p105
        %p271 = pneg %p102
        %p272 = pneg %p126
        %p273 = pneg %p123
        %p274 = pneg %p147
        %p275 = pneg %p144
        %p276 = pneg %p168
        %p277 = pneg %p165
        %p278 = pneg %p194
        %p279 = pneg %p191
        %s280 = sand.u32 %s181, 1
        %s281 = scalar_lea.sflag [#allocation3], %s280
        %s282 = sand.u32 %s181, 1
        %s283 = smul.addr %s282, 2
        %s284 = scalar_lea.vmem [#allocation2], %s283
        %s285 = smul.u32 16, %s21
        %s286 = ssub.s32 38, %s285
        %p287 = scmp.lt.s32.totalorder %s286, 16
        %s288 = scalar_select %p287, %s286, 16
        %s289 = smul.u32 128, %s288
        %p290 = scmp.lt.s32.totalorder %s285, 37
        %s291 = scalar_select %p290, %s285, 37
        %s292 = smul.addr %s291, 8
        %s293 = scalar_lea.vmem %s0, %s292
        %s294 = smul.u32 16, %s21
        %s295 = ssub.s32 38, %s294
        %p296 = scmp.lt.s32.totalorder %s295, 16
        %s297 = scalar_select %p296, %s295, 16
        %s298 = smul.u32 128, %s297
        %v299 = vld [vmem:[%s1] sm:$0xff]
        %v300 = vld [vmem:[%s1 + $0x8] sm:$0xff]
        %v301 = vld [vmem:[%s1 + $0x10] sm:$0xff]
        %v302 = vld [vmem:[%s1 + $0x18] sm:$0xff]
        %v303 = vld [vmem:[%s293] sm:$0xff]
        %v304 = vld [vmem:[%s293 + $0x8] sm:$0xff]
        %v305 = vld [vmem:[%s293 + $0x10] sm:$0xff]
        %v306 = vld [vmem:[%s293 + $0x18] sm:$0xff]
        %v307 = vld [vmem:[%s293 + $0x20] sm:$0xff]
        %v308 = vld [vmem:[%s293 + $0x28] sm:$0xff]
        %v309 = vld [vmem:[%s293 + $0x30] sm:$0xff]
        %v310 = vld [vmem:[%s293 + $0x38] sm:$0xff]
        %v311 = vld [vmem:[%s293 + $0x40] sm:$0xff]
        %v312 = vld [vmem:[%s293 + $0x48] sm:$0xff]
        %v313 = vld [vmem:[%s293 + $0x50] sm:$0xff]
        %v314 = vld [vmem:[%s293 + $0x58] sm:$0xff]
        %v315 = vld [vmem:[%s293 + $0x60] sm:$0xff]
        %v316 = vld [vmem:[%s293 + $0x68] sm:$0xff]
        %v317 = vld [vmem:[%s293 + $0x70] sm:$0xff]
        %v318 = vld [vmem:[%s293 + $0x78] sm:$0xff]
        %v319 = vld [vmem:[%s2] sm:$0xff]
        %v320 = vld [vmem:[%s2 + $0x8] sm:$0xff]
        %v321 = vld [vmem:[%s2 + $0x10] sm:$0xff]
        %v322 = vld [vmem:[%s2 + $0x18] sm:$0xff]
        %324 = vset.pattern.permute.xlu0 0
        %325 = vperm.xlu0 %324, %v319
        %v326 = vpop.permute.xlu0 %325
        %329 = vset.pattern.permute.xlu0 0
        %330 = vperm.xlu0 %329, %v320
        %v331 = vpop.permute.xlu0 %330
        %334 = vset.pattern.permute.xlu0 0
        %335 = vperm.xlu0 %334, %v321
        %v336 = vpop.permute.xlu0 %335
        %339 = vset.pattern.permute.xlu0 0
        %340 = vperm.xlu0 %339, %v322
        %v341 = vpop.permute.xlu0 %340
        %vm343 = vcmask 31744
        %v345 = vsel %vm343, %v299, 0
        %v348 = vsel %vm343, %v300, 0
        %v351 = vsel %vm343, %v301, 0
        %v354 = vsel %vm343, %v302, 0
        %v357 = vsel %vm343, %v303, 0
        %v360 = vsel %vm343, %v304, 0
        %v363 = vsel %vm343, %v305, 0
        %v366 = vsel %vm343, %v306, 0
        %v369 = vsel %vm343, %v307, 0
        %v372 = vsel %vm343, %v308, 0
        %v375 = vsel %vm343, %v309, 0
        %v378 = vsel %vm343, %v310, 0
        %v381 = vsel %vm343, %v311, 0
        %v384 = vsel %vm343, %v312, 0
        %v387 = vsel %vm343, %v313, 0
        %v390 = vsel %vm343, %v314, 0
        %v393 = vsel %vm343, %v315, 0
        %v396 = vsel %vm343, %v316, 0
        %v399 = vsel %vm343, %v317, 0
        %v402 = vsel %vm343, %v318, 0
        %404 = vmatprep.subr.mxu0 0.0
        %405 = vmatpush1.xpose.msra.mxu0 %v357
        %406 = vmatprep.subr.mxu0 0.0
        %407 = vmatpush1.xpose.msra.mxu0 %v360
        %408 = vmatprep.subr.mxu0 0.0
        %409 = vmatpush1.xpose.msra.mxu0 %v363
        %410 = vmatprep.subr.mxu0 0.0
        %411 = vmatpush1.xpose.msra.mxu0 %v366
        %412 = vmatprep.subr.mxu0 0.0
        %413 = vmatpush1.xpose.msra.mxu0 %v369
        %414 = vmatprep.subr.mxu0 0.0
        %415 = vmatpush1.xpose.msra.mxu0 %v372
        %416 = vmatprep.subr.mxu0 0.0
        %417 = vmatpush1.xpose.msra.mxu0 %v375
        %418 = vmatprep.subr.mxu0 0.0
        %419 = vmatpush1.xpose.msra.mxu0 %v378
        %420 = vmatprep.subr.mxu0 0.0
        %421 = vmatpush1.xpose.msra.mxu0 %v381
        %422 = vmatprep.subr.mxu0 0.0
        %423 = vmatpush1.xpose.msra.mxu0 %v384
        %424 = vmatprep.subr.mxu0 0.0
        %425 = vmatpush1.xpose.msra.mxu0 %v387
        %426 = vmatprep.subr.mxu0 0.0
        %427 = vmatpush1.xpose.msra.mxu0 %v390
        %428 = vmatprep.subr.mxu0 0.0
        %429 = vmatpush1.xpose.msra.mxu0 %v393
        %430 = vmatprep.subr.mxu0 0.0
        %431 = vmatpush1.xpose.msra.mxu0 %v396
        %432 = vmatprep.subr.mxu0 0.0
        %433 = vmatpush1.xpose.msra.mxu0 %v399
        %434 = vmatprep.subr.mxu0 0.0
        %435 = vmatpush1.xpose.msra.mxu0 %v402
        %436 = vmatprep.subr.mxu0 0.0
        %437 = vmatpush1.xpose.msra.mxu0 0.0
        %438 = vmatprep.subr.mxu0 0.0
        %439 = vmatpush1.xpose.msra.mxu0 0.0
        %440 = vmatprep.subr.mxu0 0.0
        %441 = vmatpush1.xpose.msra.mxu0 0.0
        %442 = vmatprep.subr.mxu0 0.0
        %443 = vmatpush1.xpose.msra.mxu0 0.0
        %444 = vmatprep.subr.mxu0 0.0
        %445 = vmatpush1.xpose.msra.mxu0 0.0
        %446 = vmatprep.subr.mxu0 0.0
        %447 = vmatpush1.xpose.msra.mxu0 0.0
        %448 = vmatprep.subr.mxu0 0.0
        %449 = vmatpush1.xpose.msra.mxu0 0.0
        %450 = vmatprep.subr.mxu0 0.0
        %451 = vmatpush1.xpose.msra.mxu0 0.0
        %452 = vmatprep.subr.mxu0 0.0
        %453 = vmatpush1.xpose.msra.mxu0 0.0
        %454 = vmatprep.subr.mxu0 0.0
        %455 = vmatpush1.xpose.msra.mxu0 0.0
        %456 = vmatprep.subr.mxu0 0.0
        %457 = vmatpush1.xpose.msra.mxu0 0.0
        %458 = vmatprep.subr.mxu0 0.0
        %459 = vmatpush1.xpose.msra.mxu0 0.0
        %460 = vmatprep.subr.mxu0 0.0
        %461 = vmatpush1.xpose.msra.mxu0 0.0
        %462 = vmatprep.subr.mxu0 0.0
        %463 = vmatpush1.xpose.msra.mxu0 0.0
        %464 = vmatprep.subr.mxu0 0.0
        %465 = vmatpush1.xpose.msra.mxu0 0.0
        %466 = vmatprep.subr.mxu0 0.0
        %467 = vmatpush1.xpose.msra.mxu0 0.0
        %468 = vmatprep.mubr.f32.mxu0 0.0
        %469 = vmatmul.mubr.f32.gmra.mrb[0].mxu0 %v345
        %v470 = vpop.f32.mrb[0].mxu0
        %v471 = vadd.f32 %v326, %v470
        %v472 = vpop.f32.mrb[0].mxu0
        %473 = vmatprep.mubr.f32.mxu0 0.0
        %474 = vmatmul.mubr.f32.gmra.mrb[0].mxu0 %v348
        %v475 = vpop.f32.mrb[0].mxu0
        %v476 = vadd.f32 %v331, %v475
        %v477 = vpop.f32.mrb[0].mxu0
        %478 = vmatprep.mubr.f32.mxu0 0.0
        %479 = vmatmul.mubr.f32.gmra.mrb[0].mxu0 %v351
        %v480 = vpop.f32.mrb[0].mxu0
        %v481 = vadd.f32 %v336, %v480
        %v482 = vpop.f32.mrb[0].mxu0
        %483 = vmatprep.mubr.f32.mxu0 0.0
        %484 = vmatmul.mubr.f32.gmra.mrb[0].mxu0 %v354
        %v485 = vpop.f32.mrb[0].mxu0
        %v486 = vadd.f32 %v341, %v485
        %v487 = vpop.f32.mrb[0].mxu0
        %488 = vdwg.mxu0
        %v489 = vmax.f32 %v471, 0.0
        %v490 = vmax.f32 %v476, 0.0
        %v491 = vmax.f32 %v481, 0.0
        %v492 = vmax.f32 %v486, 0.0
        %v493 = vld [vmem:[%s3] sm:$0xff]
        %v494 = vld [vmem:[%s3 + $0x8] sm:$0xff]
        %v495 = vld [vmem:[%s3 + $0x10] sm:$0xff]
        %v496 = vld [vmem:[%s3 + $0x18] sm:$0xff]
        %v497 = vld [vmem:[%s4] sm:$0xff]
        %v498 = vld [vmem:[%s4 + $0x8] sm:$0xff]
        %v499 = vld [vmem:[%s4 + $0x10] sm:$0xff]
        %v500 = vld [vmem:[%s4 + $0x18] sm:$0xff]
        %502 = vset.pattern.permute.xlu0 0
        %503 = vperm.xlu0 %502, %v497
        %v504 = vpop.permute.xlu0 %503
        %507 = vset.pattern.permute.xlu0 0
        %508 = vperm.xlu0 %507, %v498
        %v509 = vpop.permute.xlu0 %508
        %512 = vset.pattern.permute.xlu0 0
        %513 = vperm.xlu0 %512, %v499
        %v514 = vpop.permute.xlu0 %513
        %517 = vset.pattern.permute.xlu0 0
        %518 = vperm.xlu0 %517, %v500
        %v519 = vpop.permute.xlu0 %518
        %vm521 = vcmask 261120
        %v523 = vsel %vm521, %v493, 0
        %v526 = vsel %vm521, %v494, 0
        %v529 = vsel %vm521, %v495, 0
        %v532 = vsel %vm521, %v496, 0
        %534 = vmatprep.subr.mxu0 0.0
        %535 = vmatpush1.msra.mxu0 %v489
        %536 = vmatprep.subr.mxu0 0.0
        %537 = vmatpush1.msra.mxu0 %v490
        %538 = vmatprep.subr.mxu0 0.0
        %539 = vmatpush1.msra.mxu0 %v491
        %540 = vmatprep.subr.mxu0 0.0
        %541 = vmatpush1.msra.mxu0 %v492
        %542 = vmatprep.subr.mxu0 0.0
        %543 = vmatpush1.msra.mxu0 0.0
        %544 = vmatprep.subr.mxu0 0.0
        %545 = vmatpush1.msra.mxu0 0.0
        %546 = vmatprep.subr.mxu0 0.0
        %547 = vmatpush1.msra.mxu0 0.0
        %548 = vmatprep.subr.mxu0 0.0
        %549 = vmatpush1.msra.mxu0 0.0
        %550 = vmatprep.subr.mxu0 0.0
        %551 = vmatpush1.msra.mxu0 0.0
        %552 = vmatprep.subr.mxu0 0.0
        %553 = vmatpush1.msra.mxu0 0.0
        %554 = vmatprep.subr.mxu0 0.0
        %555 = vmatpush1.msra.mxu0 0.0
        %556 = vmatprep.subr.mxu0 0.0
        %557 = vmatpush1.msra.mxu0 0.0
        %558 = vmatprep.subr.mxu0 0.0
        %559 = vmatpush1.msra.mxu0 0.0
        %560 = vmatprep.subr.mxu0 0.0
        %561 = vmatpush1.msra.mxu0 0.0
        %562 = vmatprep.subr.mxu0 0.0
        %563 = vmatpush1.msra.mxu0 0.0
        %564 = vmatprep.subr.mxu0 0.0
        %565 = vmatpush1.msra.mxu0 0.0
        %566 = vmatprep.subr.mxu0 0.0
        %567 = vmatpush1.msra.mxu0 0.0
        %568 = vmatprep.subr.mxu0 0.0
        %569 = vmatpush1.msra.mxu0 0.0
        %570 = vmatprep.subr.mxu0 0.0
        %571 = vmatpush1.msra.mxu0 0.0
        %572 = vmatprep.subr.mxu0 0.0
        %573 = vmatpush1.msra.mxu0 0.0
        %574 = vmatprep.subr.mxu0 0.0
        %575 = vmatpush1.msra.mxu0 0.0
        %576 = vmatprep.subr.mxu0 0.0
        %577 = vmatpush1.msra.mxu0 0.0
        %578 = vmatprep.subr.mxu0 0.0
        %579 = vmatpush1.msra.mxu0 0.0
        %580 = vmatprep.subr.mxu0 0.0
        %581 = vmatpush1.msra.mxu0 0.0
        %582 = vmatprep.subr.mxu0 0.0
        %583 = vmatpush1.msra.mxu0 0.0
        %584 = vmatprep.subr.mxu0 0.0
        %585 = vmatpush1.msra.mxu0 0.0
        %586 = vmatprep.subr.mxu0 0.0
        %587 = vmatpush1.msra.mxu0 0.0
        %588 = vmatprep.subr.mxu0 0.0
        %589 = vmatpush1.msra.mxu0 0.0
        %590 = vmatprep.subr.mxu0 0.0
        %591 = vmatpush1.msra.mxu0 0.0
        %592 = vmatprep.subr.mxu0 0.0
        %593 = vmatpush1.msra.mxu0 0.0
        %594 = vmatprep.subr.mxu0 0.0
        %595 = vmatpush1.msra.mxu0 0.0
        %596 = vmatprep.subr.mxu0 0.0
        %597 = vmatpush1.msra.mxu0 0.0
        %598 = vmatprep.mubr.f32.mxu0 0.0
        %599 = vmatmul.mubr.f32.gmra.mrb[0].mxu0 %v523
        %v600 = vpop.f32.mrb[0].mxu0
        %v601 = vadd.f32 %v504, %v600
        %v602 = vpop.f32.mrb[0].mxu0
        %603 = vmatprep.mubr.f32.mxu0 0.0
        %604 = vmatmul.mubr.f32.gmra.mrb[0].mxu0 %v526
        %v605 = vpop.f32.mrb[0].mxu0
        %v606 = vadd.f32 %v509, %v605
        %v607 = vpop.f32.mrb[0].mxu0
        %608 = vmatprep.mubr.f32.mxu0 0.0
        %609 = vmatmul.mubr.f32.gmra.mrb[0].mxu0 %v529
        %v610 = vpop.f32.mrb[0].mxu0
        %v611 = vadd.f32 %v514, %v610
        %v612 = vpop.f32.mrb[0].mxu0
        %613 = vmatprep.mubr.f32.mxu0 0.0
        %614 = vmatmul.mubr.f32.gmra.mrb[0].mxu0 %v532
        %v615 = vpop.f32.mrb[0].mxu0
        %v616 = vadd.f32 %v519, %v615
        %v617 = vpop.f32.mrb[0].mxu0
        %618 = vdwg.mxu0
        %v619 = vmax.f32 %v601, 0.0
        %v620 = vmax.f32 %v606, 0.0
        %v621 = vmax.f32 %v611, 0.0
        %v622 = vmax.f32 %v616, 0.0
        %v623 = vld [vmem:[%s5] sm:$0x3]
        %v624 = vld [vmem:[%s6] sm:$0x3]
        %626 = vset.pattern.permute.xlu0 0
        %627 = vperm.xlu0 %626, %v624
        %v628 = vpop.permute.xlu0 %627
        %v631 = vsel %vm521, %v623, 0
        %633 = vmatprep.subr.mxu0 0.0
        %634 = vmatpush1.msra.mxu0 %v619
        %635 = vmatprep.subr.mxu0 0.0
        %636 = vmatpush1.msra.mxu0 %v620
        %637 = vmatprep.subr.mxu0 0.0
        %638 = vmatpush1.msra.mxu0 %v621
        %639 = vmatprep.subr.mxu0 0.0
        %640 = vmatpush1.msra.mxu0 %v622
        %641 = vmatprep.subr.mxu0 0.0
        %642 = vmatpush1.msra.mxu0 0.0
        %643 = vmatprep.subr.mxu0 0.0
        %644 = vmatpush1.msra.mxu0 0.0
        %645 = vmatprep.subr.mxu0 0.0
        %646 = vmatpush1.msra.mxu0 0.0
        %647 = vmatprep.subr.mxu0 0.0
        %648 = vmatpush1.msra.mxu0 0.0
        %649 = vmatprep.subr.mxu0 0.0
        %650 = vmatpush1.msra.mxu0 0.0
        %651 = vmatprep.subr.mxu0 0.0
        %652 = vmatpush1.msra.mxu0 0.0
        %653 = vmatprep.subr.mxu0 0.0
        %654 = vmatpush1.msra.mxu0 0.0
        %655 = vmatprep.subr.mxu0 0.0
        %656 = vmatpush1.msra.mxu0 0.0
        %657 = vmatprep.subr.mxu0 0.0
        %658 = vmatpush1.msra.mxu0 0.0
        %659 = vmatprep.subr.mxu0 0.0
        %660 = vmatpush1.msra.mxu0 0.0
        %661 = vmatprep.subr.mxu0 0.0
        %662 = vmatpush1.msra.mxu0 0.0
        %663 = vmatprep.subr.mxu0 0.0
        %664 = vmatpush1.msra.mxu0 0.0
        %665 = vmatprep.subr.mxu0 0.0
        %666 = vmatpush1.msra.mxu0 0.0
        %667 = vmatprep.subr.mxu0 0.0
        %668 = vmatpush1.msra.mxu0 0.0
        %669 = vmatprep.subr.mxu0 0.0
        %670 = vmatpush1.msra.mxu0 0.0
        %671 = vmatprep.subr.mxu0 0.0
        %672 = vmatpush1.msra.mxu0 0.0
        %673 = vmatprep.subr.mxu0 0.0
        %674 = vmatpush1.msra.mxu0 0.0
        %675 = vmatprep.subr.mxu0 0.0
        %676 = vmatpush1.msra.mxu0 0.0
        %677 = vmatprep.subr.mxu0 0.0
        %678 = vmatpush1.msra.mxu0 0.0
        %679 = vmatprep.subr.mxu0 0.0
        %680 = vmatpush1.msra.mxu0 0.0
        %681 = vmatprep.subr.mxu0 0.0
        %682 = vmatpush1.msra.mxu0 0.0
        %683 = vmatprep.subr.mxu0 0.0
        %684 = vmatpush1.msra.mxu0 0.0
        %685 = vmatprep.subr.mxu0 0.0
        %686 = vmatpush1.msra.mxu0 0.0
        %687 = vmatprep.subr.mxu0 0.0
        %688 = vmatpush1.msra.mxu0 0.0
        %689 = vmatprep.subr.mxu0 0.0
        %690 = vmatpush1.msra.mxu0 0.0
        %691 = vmatprep.subr.mxu0 0.0
        %692 = vmatpush1.msra.mxu0 0.0
        %693 = vmatprep.subr.mxu0 0.0
        %694 = vmatpush1.msra.mxu0 0.0
        %695 = vmatprep.subr.mxu0 0.0
        %696 = vmatpush1.msra.mxu0 0.0
        %697 = vmatprep.mubr.f32.mxu0 0.0
        %698 = vmatmul.mubr.f32.gmra.mrb[0].mxu0 %v631
        %v699 = vpop.f32.mrb[0].mxu0
        %v700 = vadd.f32 %v628, %v699
        %v701 = vpop.f32.mrb[0].mxu0
        %702 = vdwg.mxu0
        %703 = vst [vmem:[%s284] sm:$0x3] %v700
        %s704 = sand.u32 %s181, 1
        %s705 = scalar_lea.sflag [#allocation3], %s704
        %s706 = sand.u32 %s181, 1
        %s707 = smul.addr %s706, 2
        %s708 = scalar_lea.vmem [#allocation2], %s707
        // Predicated region
        $region49: #{tpu_custom_call.1} parent=47 // pred_check
          %p709 = pneg %p191
        $region50: #{tpu_custom_call.1} parent=47 // pred_check_branch
          %711 = sbr.rel (%p709) target = $region52
        $region51: #{tpu_custom_call.1} parent=47 // pred_region
          %s713 = ssub.s32 32, 32
          %714 = vsyncadd %s705, %s713
          %s715 = smul.addr %s21, 32
          %s716 = scalar_lea.hbm %s7, %s715
          %s718 = sshll.u32 %s708, 4
          %s719 = int_to_ptr.vmem [resolvable:$true] %s718
          %721 = dma.vmem_to_hbm [thread:$0]  %s719, 32, %s716, %s705
        $region52: #{tpu_custom_call.1} parent=47 // pred_fallthru
          _
      $region48: #{tpu_custom_call.1} parent=5 // pred_fallthru
        _
      %p722 = scmp.le.s32.totalorder 2, %s16
      // Predicated region
      $region53: #{tpu_custom_call.1} parent=5 // pred_check
        %p723 = pneg %p722
      $region54: #{tpu_custom_call.1} parent=5 // pred_check_branch
        %725 = sbr.rel (%p723) target = $region56
      $region55: #{tpu_custom_call.1} parent=5 // pred_region
        %s726 = ssub.s32 %s16, 2
        // Predicated region
        $region57: #{tpu_custom_call.1} parent=55 // pred_check
          %p727 = pneg %p197
        $region58: #{tpu_custom_call.1} parent=55 // pred_check_branch
          %729 = sbr.rel (%p727) target = $region60
        $region59: #{tpu_custom_call.1} parent=55 // pred_region
          %s730 = sand.u32 %s182, 1
          %s731 = scalar_lea.sflag [#allocation3], %s730
          %s732 = sand.u32 %s182, 1
          %s733 = smul.addr %s732, 2
          %s734 = scalar_lea.vmem [#allocation2], %s733
          %735 = dma.done %s731, 32
        $region60: #{tpu_custom_call.1} parent=55 // pred_fallthru
          _
      $region56: #{tpu_custom_call.1} parent=5 // pred_fallthru
        _
    $region6: #{tpu_custom_call.1} parent=1 // loop_footer
      %s20 = sadd.s32 1, %s16
    $region7: #{tpu_custom_call.1} parent=1 // loop_footer_branch
      %15 = sbr.rel target = $region3
    $region8: #{tpu_custom_call.1} parent=1 // loop_exit
      _
    %736 = vsyncpa [#allocation3], 1
    %s737 = scalar_lea.sflag [#allocation3], 1
    %738 = vsyncpa %s737, 1

</llo_original>
